<compile_context>
chip_gen: v7x
topology: tpu7x:2x2x1
jax: 0.10.0
libtpu: 0.0.40
codegen_flags: <defaults>
</compile_context>

<pallas_src>
import jax
import jax.numpy as jnp
from jax import lax
from jax.experimental import pallas as pl
from jax.experimental.pallas import tpu as pltpu


def _ce_loss_kernel(logits_ref, labels_ref, out_ref,
                    m_ref, l_ref, syx_ref, sy_ref):
    c = pl.program_id(1)
    nc = pl.num_programs(1)

    # --- init per-batch-tile running state on first class chunk ---
    @pl.when(c == 0)
    def _():
        m_ref[...] = jnp.full_like(m_ref, -jnp.inf)
        l_ref[...] = jnp.zeros_like(l_ref)
        syx_ref[...] = jnp.zeros_like(syx_ref)
        sy_ref[...] = jnp.zeros_like(sy_ref)

    x = logits_ref[...].astype(jnp.float32)   # [Bt, Nt]
    y = labels_ref[...].astype(jnp.float32)   # [Bt, Nt]

    # --- online logsumexp over the class axis (lanes) ---
    chunk_max = jnp.max(x, axis=1, keepdims=True)            # [Bt, 1]
    m_new = jnp.maximum(m_ref[...], chunk_max)                # [Bt, 1]
    alpha = jnp.exp(m_ref[...] - m_new)                       # rescale old sum
    l_ref[...] = alpha * l_ref[...] + jnp.sum(jnp.exp(x - m_new),
                                              axis=1, keepdims=True)
    m_ref[...] = m_new

    # --- accumulate sum(y*x) and sum(y) (no log_probs materialized) ---
    syx_ref[...] += jnp.sum(y * x, axis=1, keepdims=True)
    sy_ref[...] += jnp.sum(y, axis=1, keepdims=True)

    # --- finalize: write this batch tile's partial loss, lane-dense ---
    @pl.when(c == nc - 1)
    def _():
        lse = m_ref[...] + jnp.log(l_ref[...])                # [Bt, 1]
        per_row = syx_ref[...] - sy_ref[...] * lse            # [Bt, 1]
        partial = jnp.sum(per_row)                            # scalar
        sub = lax.broadcasted_iota(jnp.int32, out_ref.shape, 0)
        lane = lax.broadcasted_iota(jnp.int32, out_ref.shape, 1)
        out_ref[...] = jnp.where((sub == 0) & (lane == 0), partial, 0.0)


def _round_up(x: int, m: int) -> int:
    return (x + m - 1) // m * m


def ce_loss(logits: jax.Array, labels: jax.Array,
            *, b_tile: int | None = None, n_tile: int | None = None) -> jax.Array:
    """Matches CELoss.forward: scalar mean negative cross-entropy."""
    assert logits.shape == labels.shape and logits.ndim == 2
    B, N = logits.shape

    # Lane-dense, sublane-aligned tiles; conservative sizes fit every
    # generation's default scoped VMEM with double-buffered inputs.
    if b_tile is None:
        b_tile = min(256, _round_up(B, 8))
    if n_tile is None:
        n_tile = min(2048, _round_up(N, 128))
    b_tile = _round_up(b_tile, 8)
    n_tile = _round_up(n_tile, 128)

    B_pad = _round_up(B, b_tile)
    N_pad = _round_up(N, n_tile)

    # Pad: class/batch padding of logits uses a huge-negative finite value
    # (contributes exp(...) ~ 0, no NaNs); labels pad with 0 so padded
    # rows/columns contribute exactly 0 to the loss.
    neg = float(jnp.finfo(logits.dtype).min)
    logits_p = jnp.pad(logits, ((0, B_pad - B), (0, N_pad - N)),
                       constant_values=neg)
    labels_p = jnp.pad(labels, ((0, B_pad - B), (0, N_pad - N)))

    num_b = B_pad // b_tile
    num_c = N_pad // n_tile

    bytes_in = (logits_p.size * logits_p.dtype.itemsize
                + labels_p.size * labels_p.dtype.itemsize)
    partials = pl.pallas_call(
        _ce_loss_kernel,
        out_shape=jax.ShapeDtypeStruct((num_b * 8, 128), jnp.float32),
        grid=(num_b, num_c),
        in_specs=[
            pl.BlockSpec((b_tile, n_tile), lambda b, c: (b, c)),
            pl.BlockSpec((b_tile, n_tile), lambda b, c: (b, c)),
        ],
        out_specs=pl.BlockSpec((8, 128), lambda b, c: (b, 0)),
        scratch_shapes=[
            pltpu.VMEM((b_tile, 1), jnp.float32),  # running max m
            pltpu.VMEM((b_tile, 1), jnp.float32),  # running sum l
            pltpu.VMEM((b_tile, 1), jnp.float32),  # sum(y*x)
            pltpu.VMEM((b_tile, 1), jnp.float32),  # sum(y)
        ],
        compiler_params=pltpu.CompilerParams(
            dimension_semantics=("parallel", "arbitrary"),
            vmem_limit_bytes=32 * 1024 * 1024,
        ),
        cost_estimate=pl.CostEstimate(
            flops=int(6 * B_pad * N_pad),
            transcendentals=int(B_pad * N_pad),
            bytes_accessed=int(bytes_in + num_b * 8 * 128 * 4),
        ),
    )(logits_p, labels_p)

    # Final reduce / negate / divide by the TRUE batch size in the wrapper.
    return -jnp.sum(partials) / jnp.float32(B)


def _ref_ce_loss(logits: jax.Array, labels: jax.Array) -> jax.Array:
    logp = jax.nn.log_softmax(logits.astype(jnp.float32), axis=1)
    return -jnp.mean(jnp.sum(labels.astype(jnp.float32) * logp, axis=1))


if __name__ == "__main__":
    key = jax.random.PRNGKey(0)
    k1, k2, k3, k4 = jax.random.split(key, 4)

    # --- Test 1: module-sized demo (batch=8, n_classes=32), f32 ---
    B, N = 8, 32
    logits = jax.random.normal(k1, (B, N), dtype=jnp.float32)
    raw = jax.random.uniform(k2, (B, N), dtype=jnp.float32)
    labels = raw / jnp.sum(raw, axis=1, keepdims=True)

    loss = ce_loss(logits, labels)
    jax.block_until_ready(loss)
    ref = _ref_ce_loss(logits, labels)
    assert jnp.allclose(loss, ref, atol=1e-5, rtol=1e-5), (loss, ref)

    # --- Test 2: ragged shapes force batch padding + class chunking ---
    B2, N2 = 20, 300
    logits2 = jax.random.normal(k3, (B2, N2), dtype=jnp.float32)
    raw2 = jax.random.uniform(k4, (B2, N2), dtype=jnp.float32)
    labels2 = raw2 / jnp.sum(raw2, axis=1, keepdims=True)

    loss2 = ce_loss(logits2, labels2, b_tile=8, n_tile=128)  # grid = (3, 3)
    jax.block_until_ready(loss2)
    ref2 = _ref_ce_loss(logits2, labels2)
    assert jnp.allclose(loss2, ref2, atol=2e-5, rtol=1e-5), (loss2, ref2)

    # --- Test 3: bf16 inputs (half the HBM traffic), same kernel ---
    logits_bf = logits.astype(jnp.bfloat16)
    labels_bf = labels.astype(jnp.bfloat16)
    loss_bf = ce_loss(logits_bf, labels_bf)
    jax.block_until_ready(loss_bf)
    ref_bf = _ref_ce_loss(logits_bf, labels_bf)
    assert jnp.allclose(loss_bf, ref_bf, atol=1e-4, rtol=1e-4), (loss_bf, ref_bf)

    print("KERNEL_OK")
</pallas_src>

<mosaic_0001>
module attributes {stable_mosaic.version = 11 : i64} {
  func.func @_ce_loss_kernel(%arg0: i32, %arg1: i32, %arg2: memref<8x128xf32, #tpu.memory_space<vmem>>, %arg3: memref<8x128xf32, #tpu.memory_space<vmem>>, %arg4: memref<8x128xf32, #tpu.memory_space<vmem>>, %arg5: memref<8x1xf32, #tpu.memory_space<vmem>>, %arg6: memref<8x1xf32, #tpu.memory_space<vmem>>, %arg7: memref<8x1xf32, #tpu.memory_space<vmem>>, %arg8: memref<8x1xf32, #tpu.memory_space<vmem>>) attributes {dimension_semantics = [#tpu.dimension_semantics<parallel>, #tpu.dimension_semantics<arbitrary>], iteration_bounds = array<i64: 1, 1>, scalar_prefetch = 0 : i64, scratch_operands = 4 : i64, tpu.core_type = #tpu.core_type<tc>, window_params = [{transform_indices = @transform_0, window_bounds = array<i64: 8, 128>}, {transform_indices = @transform_1, window_bounds = array<i64: 8, 128>}, {transform_indices = @transform_2, window_bounds = array<i64: 8, 128>}]} {
    %c0_i32 = arith.constant 0 : i32
    %0 = arith.cmpi eq, %arg1, %c0_i32 : i32
    %1 = arith.extui %0 : i1 to i32
    %c0_i32_0 = arith.constant 0 : i32
    %2 = arith.cmpi ne, %1, %c0_i32_0 : i32
    scf.if %2 {
      %cst_27 = arith.constant 0xFF800000 : f32
      %36 = vector.broadcast %cst_27 : f32 to vector<8x1xf32>
      %c0_28 = arith.constant 0 : index
      %c0_29 = arith.constant 0 : index
      %37 = vector.load %arg5[%c0_28, %c0_29] : memref<8x1xf32, #tpu.memory_space<vmem>>, vector<8x1xf32>
      tpu.vector_store %arg5[%c0_28, %c0_29], %36 {strides = array<i32>} : memref<8x1xf32, #tpu.memory_space<vmem>>, vector<8x1xf32>,
      %cst_30 = arith.constant 0.000000e+00 : f32
      %38 = vector.broadcast %cst_30 : f32 to vector<8x1xf32>
      %c0_31 = arith.constant 0 : index
      %c0_32 = arith.constant 0 : index
      %39 = vector.load %arg6[%c0_31, %c0_32] : memref<8x1xf32, #tpu.memory_space<vmem>>, vector<8x1xf32>
      tpu.vector_store %arg6[%c0_31, %c0_32], %38 {strides = array<i32>} : memref<8x1xf32, #tpu.memory_space<vmem>>, vector<8x1xf32>,
      %cst_33 = arith.constant 0.000000e+00 : f32
      %40 = vector.broadcast %cst_33 : f32 to vector<8x1xf32>
      %c0_34 = arith.constant 0 : index
      %c0_35 = arith.constant 0 : index
      %41 = vector.load %arg7[%c0_34, %c0_35] : memref<8x1xf32, #tpu.memory_space<vmem>>, vector<8x1xf32>
      tpu.vector_store %arg7[%c0_34, %c0_35], %40 {strides = array<i32>} : memref<8x1xf32, #tpu.memory_space<vmem>>, vector<8x1xf32>,
      %cst_36 = arith.constant 0.000000e+00 : f32
      %42 = vector.broadcast %cst_36 : f32 to vector<8x1xf32>
      %c0_37 = arith.constant 0 : index
      %c0_38 = arith.constant 0 : index
      %43 = vector.load %arg8[%c0_37, %c0_38] : memref<8x1xf32, #tpu.memory_space<vmem>>, vector<8x1xf32>
      tpu.vector_store %arg8[%c0_37, %c0_38], %42 {strides = array<i32>} : memref<8x1xf32, #tpu.memory_space<vmem>>, vector<8x1xf32>,
    } else {
    }
    %c0 = arith.constant 0 : index
    %c0_1 = arith.constant 0 : index
    %3 = vector.load %arg2[%c0, %c0_1] : memref<8x128xf32, #tpu.memory_space<vmem>>, vector<8x128xf32>
    %c0_2 = arith.constant 0 : index
    %c0_3 = arith.constant 0 : index
    %4 = vector.load %arg3[%c0_2, %c0_3] : memref<8x128xf32, #tpu.memory_space<vmem>>, vector<8x128xf32>
    %cst = arith.constant dense<0xFF800000> : vector<8xf32>
    %5 = vector.multi_reduction <maximumf>, %3, %cst [1] : vector<8x128xf32> to vector<8xf32>
    %6 = vector.shape_cast %5 : vector<8xf32> to vector<8x1xf32>
    %c0_4 = arith.constant 0 : index
    %c0_5 = arith.constant 0 : index
    %7 = vector.load %arg5[%c0_4, %c0_5] : memref<8x1xf32, #tpu.memory_space<vmem>>, vector<8x1xf32>
    %8 = arith.maximumf %7, %6 : vector<8x1xf32>
    %c0_6 = arith.constant 0 : index
    %c0_7 = arith.constant 0 : index
    %9 = vector.load %arg5[%c0_6, %c0_7] : memref<8x1xf32, #tpu.memory_space<vmem>>, vector<8x1xf32>
    %10 = arith.subf %9, %8 : vector<8x1xf32>
    %11 = math.exp %10 : vector<8x1xf32>
    %c0_8 = arith.constant 0 : index
    %c0_9 = arith.constant 0 : index
    %12 = vector.load %arg6[%c0_8, %c0_9] : memref<8x1xf32, #tpu.memory_space<vmem>>, vector<8x1xf32>
    %13 = arith.mulf %11, %12 : vector<8x1xf32>
    %14 = vector.broadcast %8 : vector<8x1xf32> to vector<8x128xf32>
    %15 = arith.subf %3, %14 : vector<8x128xf32>
    %16 = math.exp %15 : vector<8x128xf32>
    %cst_10 = arith.constant dense<0.000000e+00> : vector<8xf32>
    %17 = vector.multi_reduction <add>, %16, %cst_10 [1] : vector<8x128xf32> to vector<8xf32>
    %18 = vector.shape_cast %17 : vector<8xf32> to vector<8x1xf32>
    %19 = arith.addf %13, %18 : vector<8x1xf32>
    %c0_11 = arith.constant 0 : index
    %c0_12 = arith.constant 0 : index
    %20 = vector.load %arg6[%c0_11, %c0_12] : memref<8x1xf32, #tpu.memory_space<vmem>>, vector<8x1xf32>
    tpu.vector_store %arg6[%c0_11, %c0_12], %19 {strides = array<i32>} : memref<8x1xf32, #tpu.memory_space<vmem>>, vector<8x1xf32>,
    %c0_13 = arith.constant 0 : index
    %c0_14 = arith.constant 0 : index
    %21 = vector.load %arg5[%c0_13, %c0_14] : memref<8x1xf32, #tpu.memory_space<vmem>>, vector<8x1xf32>
    tpu.vector_store %arg5[%c0_13, %c0_14], %8 {strides = array<i32>} : memref<8x1xf32, #tpu.memory_space<vmem>>, vector<8x1xf32>,
    %c0_15 = arith.constant 0 : index
    %c0_16 = arith.constant 0 : index
    %22 = vector.load %arg7[%c0_15, %c0_16] : memref<8x1xf32, #tpu.memory_space<vmem>>, vector<8x1xf32>
    %23 = arith.mulf %4, %3 : vector<8x128xf32>
    %cst_17 = arith.constant dense<0.000000e+00> : vector<8xf32>
    %24 = vector.multi_reduction <add>, %23, %cst_17 [1] : vector<8x128xf32> to vector<8xf32>
    %25 = vector.shape_cast %24 : vector<8xf32> to vector<8x1xf32>
    %26 = arith.addf %22, %25 : vector<8x1xf32>
    %c0_18 = arith.constant 0 : index
    %c0_19 = arith.constant 0 : index
    %27 = vector.load %arg7[%c0_18, %c0_19] : memref<8x1xf32, #tpu.memory_space<vmem>>, vector<8x1xf32>
    tpu.vector_store %arg7[%c0_18, %c0_19], %26 {strides = array<i32>} : memref<8x1xf32, #tpu.memory_space<vmem>>, vector<8x1xf32>,
    %c0_20 = arith.constant 0 : index
    %c0_21 = arith.constant 0 : index
    %28 = vector.load %arg8[%c0_20, %c0_21] : memref<8x1xf32, #tpu.memory_space<vmem>>, vector<8x1xf32>
    %cst_22 = arith.constant dense<0.000000e+00> : vector<8xf32>
    %29 = vector.multi_reduction <add>, %4, %cst_22 [1] : vector<8x128xf32> to vector<8xf32>
    %30 = vector.shape_cast %29 : vector<8xf32> to vector<8x1xf32>
    %31 = arith.addf %28, %30 : vector<8x1xf32>
    %c0_23 = arith.constant 0 : index
    %c0_24 = arith.constant 0 : index
    %32 = vector.load %arg8[%c0_23, %c0_24] : memref<8x1xf32, #tpu.memory_space<vmem>>, vector<8x1xf32>
    tpu.vector_store %arg8[%c0_23, %c0_24], %31 {strides = array<i32>} : memref<8x1xf32, #tpu.memory_space<vmem>>, vector<8x1xf32>,
    %c0_i32_25 = arith.constant 0 : i32
    %33 = arith.cmpi eq, %arg1, %c0_i32_25 : i32
    %34 = arith.extui %33 : i1 to i32
    %c0_i32_26 = arith.constant 0 : i32
    %35 = arith.cmpi ne, %34, %c0_i32_26 : i32
    scf.if %35 {
      %c0_27 = arith.constant 0 : index
      %c0_28 = arith.constant 0 : index
      %36 = vector.load %arg5[%c0_27, %c0_28] : memref<8x1xf32, #tpu.memory_space<vmem>>, vector<8x1xf32>
      %c0_29 = arith.constant 0 : index
      %c0_30 = arith.constant 0 : index
      %37 = vector.load %arg6[%c0_29, %c0_30] : memref<8x1xf32, #tpu.memory_space<vmem>>, vector<8x1xf32>
      %38 = math.log %37 : vector<8x1xf32>
      %39 = arith.addf %36, %38 : vector<8x1xf32>
      %c0_31 = arith.constant 0 : index
      %c0_32 = arith.constant 0 : index
      %40 = vector.load %arg7[%c0_31, %c0_32] : memref<8x1xf32, #tpu.memory_space<vmem>>, vector<8x1xf32>
      %c0_33 = arith.constant 0 : index
      %c0_34 = arith.constant 0 : index
      %41 = vector.load %arg8[%c0_33, %c0_34] : memref<8x1xf32, #tpu.memory_space<vmem>>, vector<8x1xf32>
      %42 = arith.mulf %41, %39 : vector<8x1xf32>
      %43 = arith.subf %40, %42 : vector<8x1xf32>
      %44 = vector.shape_cast %43 : vector<8x1xf32> to vector<1x8x1xf32>
      %cst_35 = arith.constant dense<0.000000e+00> : vector<1xf32>
      %45 = vector.multi_reduction <add>, %44, %cst_35 [1, 2] : vector<1x8x1xf32> to vector<1xf32>
      %46 = vector.shape_cast %45 : vector<1xf32> to vector<1x1x1xf32>
      %47 = vector.extract %46[0, 0, 0] : f32 from vector<1x1x1xf32>
      %48 = tpu.iota {dimensions = array<i32: 0>} : vector<8x128xi32>
      %49 = tpu.iota {dimensions = array<i32: 1>} : vector<8x128xi32>
      %c0_i32_36 = arith.constant 0 : i32
      %50 = vector.broadcast %c0_i32_36 : i32 to vector<8x128xi32>
      %51 = arith.cmpi eq, %48, %50 : vector<8x128xi32>
      %c0_i32_37 = arith.constant 0 : i32
      %52 = vector.broadcast %c0_i32_37 : i32 to vector<8x128xi32>
      %53 = arith.cmpi eq, %49, %52 : vector<8x128xi32>
      %54 = arith.andi %51, %53 : vector<8x128xi1>
      %cst_38 = arith.constant 0.000000e+00 : f32
      %55 = vector.broadcast %47 : f32 to vector<8x128xf32>
      %56 = vector.broadcast %cst_38 : f32 to vector<8x128xf32>
      %57 = arith.select %54, %55, %56 : vector<8x128xi1>, vector<8x128xf32>
      %c0_39 = arith.constant 0 : index
      %c0_40 = arith.constant 0 : index
      %58 = vector.load %arg4[%c0_39, %c0_40] : memref<8x128xf32, #tpu.memory_space<vmem>>, vector<8x128xf32>
      tpu.vector_store %arg4[%c0_39, %c0_40], %57 {strides = array<i32>} : memref<8x128xf32, #tpu.memory_space<vmem>>, vector<8x128xf32>,
    } else {
    }
    return
  }
  func.func @transform_0(%arg0: i32, %arg1: i32) -> (i32, i32) {
    %c0_i32 = arith.constant 0 : i32
    return %arg0, %arg1 : i32, i32
  }
  func.func @transform_1(%arg0: i32, %arg1: i32) -> (i32, i32) {
    %c0_i32 = arith.constant 0 : i32
    return %arg0, %arg1 : i32, i32
  }
  func.func @transform_2(%arg0: i32, %arg1: i32) -> (i32, i32) {
    %c0_i32 = arith.constant 0 : i32
    %c0_i32_0 = arith.constant 0 : i32
    return %arg0, %c0_i32 : i32, i32
  }
}

</mosaic_0001>

<llo_original>
// kernel: tpu_custom_call.1
$region0: #{tpu_custom_call.1}
  #allocation0 [shape = 'u32[]', space=smem, size = 0x4, offset = 0x4, fixed_abs, tag = 'smem constant byte address 0x4 - core index']
  #allocation1 [shape = 'u32[144,128]{1,0:T(1,128)}', space=vmem, size = 0x12000, scoped, tag = 'internal scratch']
  #allocation2 [shape = 'f32[8,1]{1,0:T(8,128)}', space=vmem, size = 0x1000, scoped, tag = 'scratch operand']
  #allocation3 [shape = 'f32[8,1]{1,0:T(8,128)}', space=vmem, size = 0x1000, scoped, tag = 'scratch operand']
  #allocation4 [shape = 'f32[8,1]{1,0:T(8,128)}', space=vmem, size = 0x1000, scoped, tag = 'scratch operand']
  #allocation5 [shape = 'f32[8,1]{1,0:T(8,128)}', space=vmem, size = 0x1000, scoped, tag = 'scratch operand']
  %s0 = inlined_call_operand.hbm [shape: f32[8,128], index: 0, kind: input, shape index: {}]
  %s1 = inlined_call_operand.hbm [shape: f32[8,128], index: 1, kind: input, shape index: {}]
  %s2 = inlined_call_operand.hbm [shape: f32[8,128], index: 2, kind: output, shape index: {}]
  %s3 = sld [smem:[#allocation0]]
  $region34: #{tpu_custom_call.1} parent=0
    _
  %s5 = ssub.s32 1, %s3
  %s6 = scalar_select 0, %s5, %s3
  $region1: #{tpu_custom_call.1} parent=0
    #allocation6 [shape = 'u8[4096]{0}', space=vmem, size = 0x1000, scoped, tag = 'input window, operand 0, single buffered']
    #allocation7 [shape = 's32[1]{0}', space=sflag, size = 0x4, scoped, tag = 'scoped memory for tpu_custom_call.1']
    #allocation8 [shape = 's32[1]{0}', space=sflag, size = 0x4, scoped, tag = 'scoped memory for tpu_custom_call.1']
    #allocation9 [shape = 'u8[4096]{0}', space=vmem, size = 0x1000, scoped, tag = 'input window, operand 1, single buffered']
    #allocation10 [shape = 's32[1]{0}', space=sflag, size = 0x4, scoped, tag = 'scoped memory for tpu_custom_call.1']
    #allocation11 [shape = 'u8[4096]{0}', space=vmem, size = 0x1000, scoped, tag = 'output window, operand 0, single buffered']
    %7 = vsyncpa [#allocation7], 0
    %8 = vsyncpa [#allocation10], 0
    %9 = vsyncpa [#allocation8], 0
    // Predicated region
    $region2: #{tpu_custom_call.1} parent=1 // pred_check
      _
    $region3: #{tpu_custom_call.1} parent=1 // pred_check_branch
      %11 = sbr.rel (0) target = $region5
    $region4: #{tpu_custom_call.1} parent=1 // pred_region
      %s13 = ssub.s32 128, 128
      %14 = vsyncadd [#allocation7], %s13
      %s16 = sshll.u32 [#allocation6], 4
      %s17 = int_to_ptr.vmem [resolvable:$true] %s16
      %19 = dma.hbm_to_vmem [thread:$0]  %s0, 128, %s17, [#allocation7]
    $region5: #{tpu_custom_call.1} parent=1 // pred_fallthru
      _
    // Predicated region
    $region6: #{tpu_custom_call.1} parent=1 // pred_check
      _
    $region7: #{tpu_custom_call.1} parent=1 // pred_check_branch
      %21 = sbr.rel (0) target = $region9
    $region8: #{tpu_custom_call.1} parent=1 // pred_region
      %s23 = ssub.s32 128, 128
      %24 = vsyncadd [#allocation10], %s23
      %s26 = sshll.u32 [#allocation9], 4
      %s27 = int_to_ptr.vmem [resolvable:$true] %s26
      %29 = dma.hbm_to_vmem [thread:$0]  %s1, 128, %s27, [#allocation10]
    $region9: #{tpu_custom_call.1} parent=1 // pred_fallthru
      _
    // Predicated region
    $region10: #{tpu_custom_call.1} parent=1 // pred_check
      _
    $region11: #{tpu_custom_call.1} parent=1 // pred_check_branch
      %31 = sbr.rel (0) target = $region13
    $region12: #{tpu_custom_call.1} parent=1 // pred_region
      %32 = dma.done [#allocation7], 128
    $region13: #{tpu_custom_call.1} parent=1 // pred_fallthru
      _
    // Predicated region
    $region14: #{tpu_custom_call.1} parent=1 // pred_check
      _
    $region15: #{tpu_custom_call.1} parent=1 // pred_check_branch
      %34 = sbr.rel (0) target = $region17
    $region16: #{tpu_custom_call.1} parent=1 // pred_region
      %35 = dma.done [#allocation10], 128
    $region17: #{tpu_custom_call.1} parent=1 // pred_fallthru
      _
    %p36 = scmp.eq.s32.totalorder 0, 0
    // Predicated region
    $region18: #{tpu_custom_call.1} parent=1 // pred_check
      %p37 = pneg %p36
    $region19: #{tpu_custom_call.1} parent=1 // pred_check_branch
      %39 = sbr.rel (%p37) target = $region21
    $region20: #{tpu_custom_call.1} parent=1 // pred_region
      %vm40 = vcmask 7168
      %41 = vst.msk [vmem:[#allocation2] sm:$0xff] %vm40, -inf
      %42 = vst.msk [vmem:[#allocation3] sm:$0xff] %vm40, 0.0
      %43 = vst.msk [vmem:[#allocation4] sm:$0xff] %vm40, 0.0
      %44 = vst.msk [vmem:[#allocation5] sm:$0xff] %vm40, 0.0
    $region21: #{tpu_custom_call.1} parent=1 // pred_fallthru
      _
    %v45 = vld [vmem:[#allocation6] sm:$0xff]
    %v46 = vld [vmem:[#allocation9] sm:$0xff]
    %47 = vmax.xlane.f32.xlu0 %v45
    %v48 = vpop.xlane.xlu0 %47
    %v49 = vld [vmem:[#allocation2] sm:$0xff]
    %v50 = vmax.f32 %v49, %v48
    %v51 = vsub.f32 %v49, %v50
    %v52 = vmul.f32 %v51, 1.442695
    %v53 = vpow.pop %v52
    %v54 = vld [vmem:[#allocation3] sm:$0xff]
    %v55 = vmul.f32 %v53, %v54
    %57 = vset.pattern.permute.xlu0 0
    %58 = vperm.xlu0 %57, %v50
    %v59 = vpop.permute.xlu0 %58
    %v61 = vsub.f32 %v45, %v59
    %v62 = vmul.f32 %v61, 1.442695
    %v63 = vpow.pop %v62
    %64 = vadd.xlane.f32.xlu0 %v63
    %v65 = vpop.xlane.xlu0 %64
    %v66 = vadd.f32 %v55, %v65
    %vm67 = vcmask 7168
    %68 = vst.msk [vmem:[#allocation3] sm:$0xff] %vm67, %v66
    %69 = vst.msk [vmem:[#allocation2] sm:$0xff] %vm67, %v50
    %v70 = vld [vmem:[#allocation4] sm:$0xff]
    %v71 = vmul.f32 %v46, %v45
    %72 = vadd.xlane.f32.xlu0 %v71
    %v73 = vpop.xlane.xlu0 %72
    %v74 = vadd.f32 %v70, %v73
    %75 = vst.msk [vmem:[#allocation4] sm:$0xff] %vm67, %v74
    %v76 = vld [vmem:[#allocation5] sm:$0xff]
    %77 = vadd.xlane.f32.xlu0 %v46
    %v78 = vpop.xlane.xlu0 %77
    %v79 = vadd.f32 %v76, %v78
    %80 = vst.msk [vmem:[#allocation5] sm:$0xff] %vm67, %v79
    // Predicated region
    $region22: #{tpu_custom_call.1} parent=1 // pred_check
      %p81 = pneg %p36
    $region23: #{tpu_custom_call.1} parent=1 // pred_check_branch
      %83 = sbr.rel (%p81) target = $region25
    $region24: #{tpu_custom_call.1} parent=1 // pred_region
      %v84 = vld [vmem:[#allocation2] sm:$0xff]
      %v85 = vld [vmem:[#allocation3] sm:$0xff]
      %v86 = vlog2.pop %v85
      %v87 = vmul.f32 %v86, 0.6931472
      %v88 = vadd.f32 %v84, %v87
      %v89 = vld [vmem:[#allocation4] sm:$0xff]
      %v90 = vld [vmem:[#allocation5] sm:$0xff]
      %v91 = vmul.f32 %v90, %v88
      %v92 = vsub.f32 %v89, %v91
      %v93 = vsel %vm67, %v92, 0.0
      %94 = vadd.xlane.f32.xlu0 %v93
      %v95 = vpop.xlane.xlu0 %94
      %v96 = vrot.slane %v95, 4
      %v97 = vadd.f32 %v95, %v96
      %v98 = vrot.slane %v97, 2
      %v99 = vadd.f32 %v97, %v98
      %v100 = vrot.slane %v99, 1
      %v101 = vadd.f32 %v99, %v100
      %s102 = vtos %v101
      %v103 = vlaneseq
      %v104 = vshrl.u32 %v103, 7
      %v105 = vlaneseq
      %v106 = vand.u32 %v105, 127
      %vm107 = vcmp.eq.s32.totalorder %v104, 0
      %vm108 = vcmp.eq.s32.totalorder %v106, 0
      %vm109 = vmand %vm107, %vm108
      %v110 = vstv %s102
      %v111 = vsel %vm109, %v110, 0.0
      %112 = vst [vmem:[#allocation11] sm:$0xff] %v111
    $region25: #{tpu_custom_call.1} parent=1 // pred_fallthru
      _
    // Predicated region
    $region26: #{tpu_custom_call.1} parent=1 // pred_check
      _
    $region27: #{tpu_custom_call.1} parent=1 // pred_check_branch
      %114 = sbr.rel (0) target = $region29
    $region28: #{tpu_custom_call.1} parent=1 // pred_region
      %s116 = ssub.s32 128, 128
      %117 = vsyncadd [#allocation8], %s116
      %s119 = sshll.u32 [#allocation11], 4
      %s120 = int_to_ptr.vmem [resolvable:$true] %s119
      %122 = dma.vmem_to_hbm [thread:$0]  %s120, 128, %s2, [#allocation8]
    $region29: #{tpu_custom_call.1} parent=1 // pred_fallthru
      _
    // Predicated region
    $region30: #{tpu_custom_call.1} parent=1 // pred_check
      _
    $region31: #{tpu_custom_call.1} parent=1 // pred_check_branch
      %124 = sbr.rel (0) target = $region33
    $region32: #{tpu_custom_call.1} parent=1 // pred_region
      %125 = dma.done [#allocation8], 128
    $region33: #{tpu_custom_call.1} parent=1 // pred_fallthru
      _
    %126 = vsyncpa [#allocation7], 1
    %127 = vsyncpa [#allocation10], 1
    %128 = vsyncpa [#allocation8], 1

</llo_original>
